<compile_context>
chip_gen: v7x
topology: tpu7x:2x2x1
jax: 0.10.0
libtpu: 0.0.40
codegen_flags: <defaults>
</compile_context>

<pallas_src>
import functools

import jax
import jax.numpy as jnp
from jax.experimental import pallas as pl
from jax.experimental.pallas import tpu as pltpu


# ----------------------------------------------------------------------------
# small helpers
# ----------------------------------------------------------------------------
def _round_up(x, m):
    return (x + m - 1) // m * m


def _padded_bytes(block_shape, dtype):
    """Rough VMEM footprint of one block after (8,128) trailing-dim padding."""
    itemsize = jnp.dtype(dtype).itemsize
    dims = list(block_shape)
    if len(dims) >= 2:
        dims[-2] = _round_up(dims[-2], 8)
    dims[-1] = _round_up(dims[-1], 128)
    n = 1
    for d in dims:
        n *= d
    return n * itemsize


def _largest_divisor(total, cap):
    """Largest divisor of `total` that is <= cap (at least 1)."""
    cap = max(1, min(int(cap), total))
    for d in range(cap, 0, -1):
        if total % d == 0:
            return d
    return 1


def _vmem_limit(live_bytes):
    """Scoped-VMEM request: 2x headroom, floored at 16 MiB, capped well under
    v7x's 64 MiB physical VMEM so the same code runs on v5e/v6e/v7x."""
    return int(min(max(2 * int(live_bytes), 16 * 1024 * 1024), 48 * 1024 * 1024))


def _min_value(dtype):
    dtype = jnp.dtype(dtype)
    if jnp.issubdtype(dtype, jnp.floating):
        return float("-inf")
    return int(jnp.iinfo(dtype).min)


# ----------------------------------------------------------------------------
# global average pooling:  (N, C, H, W) -> (N, C, 1, 1)
# ----------------------------------------------------------------------------
_GAP_BLOCK_BUDGET = 8 * 1024 * 1024   # padded, double-buffered input bytes/step


def _global_avg_kernel(x_ref, o_ref, *, inv_hw):
    """x_ref: (TN, TC, H*W) block (reduce over lanes); o_ref: (TN, 1, TC)."""
    s = jnp.sum(x_ref[...].astype(jnp.float32), axis=-1)      # f32 accumulation
    o_ref[...] = (s * inv_hw)[:, None, :].astype(o_ref.dtype)


def global_avg_pool(x):
    """x: (N, C, H, W) -> (N, C, 1, 1)."""
    N, C, H, W = x.shape
    HW = H * W
    x2 = x.reshape(N, C, HW)                      # free reshape; H*W on lanes
    itemsize = jnp.dtype(x.dtype).itemsize

    # Biggest batch-chunk that fits the budget; then make sure there are at
    # least 2 grid steps (megacore on v7x) when the problem allows it.
    per_image = 2 * _padded_bytes((1, C, HW), x.dtype)
    tn = _largest_divisor(N, max(1, _GAP_BLOCK_BUDGET // max(per_image, 1)))
    tc = C
    if N // tn == 1:
        if N > 1:
            tn = _largest_divisor(N, N // 2)
        elif C % 256 == 0:
            tc = C // 2        # 128-aligned channel split keeps out-tile legal

    grid = (N // tn, C // tc)
    in_block = (tn, tc, HW)
    out_block = (tn, 1, tc)
    live = 2 * (_padded_bytes(in_block, x.dtype) + _padded_bytes(out_block, x.dtype))

    y = pl.pallas_call(
        functools.partial(_global_avg_kernel, inv_hw=1.0 / HW),
        out_shape=jax.ShapeDtypeStruct((N, 1, C), x.dtype),
        grid=grid,
        in_specs=[pl.BlockSpec(in_block, lambda n, c: (n, c, 0))],
        out_specs=pl.BlockSpec(out_block, lambda n, c: (n, 0, c)),
        compiler_params=pltpu.CompilerParams(
            dimension_semantics=("parallel", "parallel"),
            vmem_limit_bytes=_vmem_limit(live)),
        cost_estimate=pl.CostEstimate(
            flops=N * C * HW,
            transcendentals=0,
            bytes_accessed=N * C * HW * itemsize + N * C * itemsize),
    )(x2)
    return y.reshape(N, C, 1, 1)                  # free reshape


# ----------------------------------------------------------------------------
# windowed avg / max pooling:  (N, C, H, W) -> (N, C, Ho, Wo)
# ----------------------------------------------------------------------------
_WIN_VMEM_BUDGET = 12 * 1024 * 1024   # in/out double-buffers + pad scratch


def _pool_taps(x, *, kernel_size, stride, out_h, out_w, op):
    """x: (TC, Hin, Win) value; returns (TC, Ho, Wo) pooled value (VPU only)."""
    tc = x.shape[0]
    k, s = kernel_size, stride
    h_hi = (out_h - 1) * s + 1
    w_hi = (out_w - 1) * s + 1

    def tap(kh, kw):
        return jax.lax.slice(x, (0, kh, kw), (tc, kh + h_hi, kw + w_hi), (1, s, s))

    acc = tap(0, 0)
    if op == "avg":
        acc = acc.astype(jnp.float32)             # accumulate in f32
    for kh in range(k):
        for kw in range(k):
            if kh == 0 and kw == 0:
                continue
            t = tap(kh, kw)
            acc = acc + t if op == "avg" else jnp.maximum(acc, t)
    if op == "avg":
        acc = acc * (1.0 / (k * k))               # count_include_pad=True semantics
    # TODO(synk): k=s=2 pltpu.roll neighbour-combine would halve the strided
    # lane extracts; skipped — kernel is memory-bound, tiling dominates.
    return acc


def _window_pool_kernel(x_ref, o_ref, *, kernel_size, stride, op):
    """padding == 0.  x_ref: (1, TC, H, W); o_ref: (1, TC, Ho, Wo)."""
    _, _, out_h, out_w = o_ref.shape
    acc = _pool_taps(x_ref[0], kernel_size=kernel_size, stride=stride,
                     out_h=out_h, out_w=out_w, op=op)
    o_ref[...] = acc[None].astype(o_ref.dtype)


def _window_pool_padded_kernel(x_ref, o_ref, pad_ref, *, kernel_size, stride,
                               padding, op):
    """padding > 0.  Halo is built on-chip: pad_ref (TC, H+2p, W+2p) VMEM
    scratch is pre-filled with 0 / -inf and the interior overwritten — no
    wrapper-side jnp.pad (no extra full-tensor HBM pass)."""
    _, _, out_h, out_w = o_ref.shape
    _, _, in_h, in_w = x_ref.shape
    pad_val = 0.0 if op == "avg" else _min_value(x_ref.dtype)
    pad_ref[...] = jnp.full(pad_ref.shape, pad_val, pad_ref.dtype)
    pad_ref[:, padding:padding + in_h, padding:padding + in_w] = x_ref[0]
    acc = _pool_taps(pad_ref[...], kernel_size=kernel_size, stride=stride,
                     out_h=out_h, out_w=out_w, op=op)
    o_ref[...] = acc[None].astype(o_ref.dtype)


def window_pool(x, pool_type, kernel_size, stride, padding=0, ceil_mode=False):
    """x: (N, C, H, W) -> (N, C, Ho, Wo); pool_type in {'avg', 'max'}."""
    if ceil_mode:
        # TODO(synk): ceil_mode=True is not implemented (unused by defaults).
        raise NotImplementedError("ceil_mode=True is not supported")
    if stride is None:
        stride = kernel_size

    N, C, H, W = x.shape
    itemsize = jnp.dtype(x.dtype).itemsize
    hin, win = H + 2 * padding, W + 2 * padding
    ho = (hin - kernel_size) // stride + 1
    wo = (win - kernel_size) // stride + 1

    # Channel-chunked grid sized against a per-step VMEM budget (works on
    # v5e / v6e / v7x); when N == 1 force >=2 channel chunks so the second
    # v7x TensorCore gets work.
    per_c = (2 * _padded_bytes((1, 1, H, W), x.dtype)
             + 2 * _padded_bytes((1, 1, ho, wo), x.dtype))
    if padding > 0:
        per_c += _padded_bytes((1, hin, win), x.dtype)
    cap = max(1, _WIN_VMEM_BUDGET // max(per_c, 1))
    if N == 1:
        cap = min(cap, max(1, C // 2))
    tc = _largest_divisor(C, cap)

    in_block = (1, tc, H, W)
    out_block = (1, tc, ho, wo)
    live = tc * per_c

    if padding > 0:
        kernel = functools.partial(_window_pool_padded_kernel,
                                   kernel_size=kernel_size, stride=stride,
                                   padding=padding, op=pool_type)
        scratch = [pltpu.VMEM((tc, hin, win), x.dtype)]
    else:
        kernel = functools.partial(_window_pool_kernel,
                                   kernel_size=kernel_size, stride=stride,
                                   op=pool_type)
        scratch = []

    return pl.pallas_call(
        kernel,
        out_shape=jax.ShapeDtypeStruct((N, C, ho, wo), x.dtype),
        grid=(N, C // tc),
        in_specs=[pl.BlockSpec(in_block, lambda n, c: (n, c, 0, 0))],
        out_specs=pl.BlockSpec(out_block, lambda n, c: (n, c, 0, 0)),
        scratch_shapes=scratch,
        compiler_params=pltpu.CompilerParams(
            dimension_semantics=("parallel", "parallel"),
            vmem_limit_bytes=_vmem_limit(live)),
        cost_estimate=pl.CostEstimate(
            flops=N * C * ho * wo * kernel_size * kernel_size,
            transcendentals=0,
            bytes_accessed=(N * C * H * W + N * C * ho * wo) * itemsize),
    )(x)


# ----------------------------------------------------------------------------
# module wrapper mirroring the PyTorch PoolingLayer
# ----------------------------------------------------------------------------
class PoolingLayer:
    def __init__(self, pool_type='global_avg', kernel_size=2, stride=2,
                 padding=0, ceil_mode=False, in_channels=None):
        self.pool_type = pool_type
        self.kernel_size = kernel_size
        self.stride = stride
        self.padding = padding
        self.ceil_mode = ceil_mode
        self.in_channels = in_channels

    def __call__(self, x):
        if self.pool_type == 'global_avg':
            return global_avg_pool(x)
        elif self.pool_type in ('avg', 'max'):
            return window_pool(x, self.pool_type, self.kernel_size,
                               self.stride, self.padding, self.ceil_mode)
        else:
            return x   # identity (self.pooling is None in the PyTorch module)


# ----------------------------------------------------------------------------
# demo / correctness check
# ----------------------------------------------------------------------------
if __name__ == "__main__":
    key = jax.random.PRNGKey(0)
    x = jax.random.normal(key, (2, 4, 16, 16), jnp.float32)   # NCHW

    # default config: global average pooling
    gap = PoolingLayer(pool_type='global_avg')
    out_gap = jax.block_until_ready(gap(x))
    ref_gap = jnp.mean(x, axis=(2, 3), keepdims=True)
    assert out_gap.shape == (2, 4, 1, 1), out_gap.shape
    assert jnp.allclose(out_gap, ref_gap, atol=1e-5, rtol=1e-5), "global_avg mismatch"

    # avg pool, kernel=2 stride=2 padding=0
    avg = PoolingLayer(pool_type='avg', kernel_size=2, stride=2, padding=0)
    out_avg = jax.block_until_ready(avg(x))
    ref_avg = jax.lax.reduce_window(
        x, 0.0, jax.lax.add, (1, 1, 2, 2), (1, 1, 2, 2), 'VALID') / 4.0
    assert out_avg.shape == (2, 4, 8, 8), out_avg.shape
    assert jnp.allclose(out_avg, ref_avg, atol=1e-5, rtol=1e-5), "avg mismatch"

    # max pool, kernel=2 stride=2 padding=0
    mx = PoolingLayer(pool_type='max', kernel_size=2, stride=2, padding=0)
    out_max = jax.block_until_ready(mx(x))
    ref_max = jax.lax.reduce_window(
        x, -jnp.inf, jax.lax.max, (1, 1, 2, 2), (1, 1, 2, 2), 'VALID')
    assert out_max.shape == (2, 4, 8, 8), out_max.shape
    assert jnp.allclose(out_max, ref_max, atol=1e-5, rtol=1e-5), "max mismatch"

    # max pool with padding (in-kernel halo path), kernel=3 stride=2 padding=1
    mxp = PoolingLayer(pool_type='max', kernel_size=3, stride=2, padding=1)
    out_maxp = jax.block_until_ready(mxp(x))
    ref_maxp = jax.lax.reduce_window(
        x, -jnp.inf, jax.lax.max, (1, 1, 3, 3), (1, 1, 2, 2),
        ((0, 0), (0, 0), (1, 1), (1, 1)))
    assert out_maxp.shape == (2, 4, 8, 8), out_maxp.shape
    assert jnp.allclose(out_maxp, ref_maxp, atol=1e-5, rtol=1e-5), "max(pad) mismatch"

    # avg pool with padding (count_include_pad=True), kernel=3 stride=2 padding=1
    avgp = PoolingLayer(pool_type='avg', kernel_size=3, stride=2, padding=1)
    out_avgp = jax.block_until_ready(avgp(x))
    ref_avgp = jax.lax.reduce_window(
        x, 0.0, jax.lax.add, (1, 1, 3, 3), (1, 1, 2, 2),
        ((0, 0), (0, 0), (1, 1), (1, 1))) / 9.0
    assert out_avgp.shape == (2, 4, 8, 8), out_avgp.shape
    assert jnp.allclose(out_avgp, ref_avgp, atol=1e-5, rtol=1e-5), "avg(pad) mismatch"

    # identity path (pooling is None)
    ident = PoolingLayer(pool_type='none')
    out_id = ident(x)
    assert jnp.array_equal(out_id, x), "identity mismatch"

    print("KERNEL_OK")
</pallas_src>

<mosaic_0001>
module attributes {stable_mosaic.version = 11 : i64} {
  func.func @_global_avg_kernel(%arg0: i32, %arg1: i32, %arg2: memref<1x4x256xf32, #tpu.memory_space<vmem>>, %arg3: memref<1x1x4xf32, #tpu.memory_space<vmem>>) attributes {dimension_semantics = [#tpu.dimension_semantics<parallel>, #tpu.dimension_semantics<parallel>], iteration_bounds = array<i64: 2, 1>, scalar_prefetch = 0 : i64, scratch_operands = 0 : i64, tpu.core_type = #tpu.core_type<tc>, window_params = [{transform_indices = @transform_0, window_bounds = array<i64: 1, 4, 256>}, {transform_indices = @transform_1, window_bounds = array<i64: 1, 1, 4>}]} {
    %c0 = arith.constant 0 : index
    %c0_0 = arith.constant 0 : index
    %c0_1 = arith.constant 0 : index
    %0 = vector.load %arg2[%c0, %c0_0, %c0_1] : memref<1x4x256xf32, #tpu.memory_space<vmem>>, vector<1x4x256xf32>
    %cst = arith.constant dense<0.000000e+00> : vector<1x4xf32>
    %1 = vector.multi_reduction <add>, %0, %cst [2] : vector<1x4x256xf32> to vector<1x4xf32>
    %cst_2 = arith.constant 3.906250e-03 : f32
    %2 = vector.broadcast %cst_2 : f32 to vector<1x4xf32>
    %3 = arith.mulf %1, %2 : vector<1x4xf32>
    %4 = vector.shape_cast %3 : vector<1x4xf32> to vector<1x1x4xf32>
    %c0_3 = arith.constant 0 : index
    %c0_4 = arith.constant 0 : index
    %c0_5 = arith.constant 0 : index
    %5 = vector.load %arg3[%c0_3, %c0_4, %c0_5] : memref<1x1x4xf32, #tpu.memory_space<vmem>>, vector<1x1x4xf32>
    tpu.vector_store %arg3[%c0_3, %c0_4, %c0_5], %4 {strides = array<i32>} : memref<1x1x4xf32, #tpu.memory_space<vmem>>, vector<1x1x4xf32>,
    return
  }
  func.func @transform_0(%arg0: i32, %arg1: i32) -> (i32, i32, i32) {
    %c0_i32 = arith.constant 0 : i32
    %c0_i32_0 = arith.constant 0 : i32
    return %arg0, %arg1, %c0_i32 : i32, i32, i32
  }
  func.func @transform_1(%arg0: i32, %arg1: i32) -> (i32, i32, i32) {
    %c0_i32 = arith.constant 0 : i32
    %c0_i32_0 = arith.constant 0 : i32
    return %arg0, %c0_i32, %arg1 : i32, i32, i32
  }
}

</mosaic_0001>

<llo_original>
// kernel: tpu_custom_call.1
$region0: #{tpu_custom_call.1}
  #allocation0 [shape = 'u32[]', space=smem, size = 0x4, offset = 0x4, fixed_abs, tag = 'smem constant byte address 0x4 - core index']
  #allocation1 [shape = 'u32[144,128]{1,0:T(1,128)}', space=vmem, size = 0x12000, scoped, tag = 'internal scratch']
  %s0 = inlined_call_operand.hbm [shape: f32[2,4,256], index: 0, kind: input, shape index: {}]
  %s1 = inlined_call_operand.hbm [shape: f32[2,1,4], index: 1, kind: output, shape index: {}]
  %s2 = sld [smem:[#allocation0]]
  $region41: #{tpu_custom_call.1} parent=0
    _
  %s4 = ssub.s32 1, %s2
  %s5 = scalar_select 0, %s4, %s2
  $region1: #{tpu_custom_call.1} parent=0
    #allocation2 [shape = 'u8[8192]{0}', space=vmem, size = 0x2000, scoped, tag = 'input window, operand 0']
    #allocation3 [shape = 's32[2]{0}', space=sflag, size = 0x8, scoped, tag = 'scoped memory for tpu_custom_call.1']
    #allocation4 [shape = 's32[2]{0}', space=sflag, size = 0x8, scoped, tag = 'scoped memory for tpu_custom_call.1']
    #allocation5 [shape = 'u8[1024]{0}', space=vmem, size = 0x400, scoped, tag = 'output window, operand 0']
    %6 = vsyncpa [#allocation3], 0
    %s7 = scalar_lea.sflag [#allocation3], 1
    %8 = vsyncpa %s7, 0
    %9 = vsyncpa [#allocation4], 0
    %s10 = scalar_lea.sflag [#allocation4], 1
    %11 = vsyncpa %s10, 0
    loop: start=0, step=1, limit=4
    $region2: #{tpu_custom_call.1} parent=1 // loop_pre_header
      _
    $region3: #{tpu_custom_call.1} parent=1 // loop_header
      %s13 = sphi 0, %s17
      %p14 = scmp.ge.s32.totalorder %s13, 4
      %s20 = sphi 0, %s32
      %s21 = sphi 0, %s28
      %s22 = sphi 0, %s20
      %s23 = sphi 0, %s21
      %s24 = sphi 0, %s22
      %s25 = sphi 0, %s23
      %s37 = sphi 0, %s39
      %s40 = sphi 0, %s37
      %s41 = sphi 0, %s40
      %s57 = sphi 0, %s41
      %s65 = sphi 0, %s67
      %s68 = sphi 0, %s65
      %s69 = sphi 0, %s68
      %s85 = sphi 0, %s69
    $region4: #{tpu_custom_call.1} parent=1 // loop_header_branch
      %16 = sbr.rel (%p14) target = $region8
    $region5: #{tpu_custom_call.1} parent=1 // loop_body
      %s18 = ssub.s32 %s13, 1
      %s19 = ssub.s32 %s13, 2
      %s26 = sadd.s32 1, %s21
      %p27 = scmp.ge.s32.totalorder %s26, 1
      %s28 = scalar_select %p27, 0, %s26
      %s29 = sadd.s32 1, %s20
      %s30 = scalar_select %p27, %s29, %s20
      %p31 = scmp.ge.s32.totalorder %s30, 2
      %s32 = scalar_select %p31, 0, %s30
      %s33 = ssub.s32 %s20, %s32
      %s34 = ssub.s32 %s21, %s28
      %s35 = sor.u32 %s33, %s34
      %p36 = scmp.eq.s32.totalorder %s35, 0
      %s38 = sadd.s32 %s37, 1
      %s39 = scalar_select %p36, %s37, %s38
      %p42 = pneg %p36
      %p43 = scmp.eq.s32.totalorder %s13, 1
      %p44 = por %p42, %p43
      %p45 = scmp.ne.s32.totalorder %s37, %s40
      %p46 = scmp.eq.s32.totalorder %s13, 0
      %p47 = por %p45, %p46
      %p48 = scmp.ne.s32.totalorder %s37, %s40
      %p49 = scmp.eq.s32.totalorder %s18, 1
      %p50 = por %p48, %p49
      %p51 = scmp.ne.s32.totalorder %s40, %s41
      %p52 = scmp.eq.s32.totalorder %s18, 0
      %p53 = por %p51, %p52
      %p54 = scmp.ne.s32.totalorder %s40, %s41
      %p55 = scmp.eq.s32.totalorder %s19, 1
      %p56 = por %p54, %p55
      %p58 = scmp.ne.s32.totalorder %s41, %s57
      %p59 = scmp.eq.s32.totalorder %s19, 0
      %p60 = por %p58, %p59
      %s61 = ssub.s32 %s20, %s32
      %s62 = ssub.s32 %s21, %s28
      %s63 = sor.u32 %s61, %s62
      %p64 = scmp.eq.s32.totalorder %s63, 0
      %s66 = sadd.s32 %s65, 1
      %s67 = scalar_select %p64, %s65, %s66
      %p70 = pneg %p64
      %p71 = scmp.eq.s32.totalorder %s13, 1
      %p72 = por %p70, %p71
      %p73 = scmp.ne.s32.totalorder %s65, %s68
      %p74 = scmp.eq.s32.totalorder %s13, 0
      %p75 = por %p73, %p74
      %p76 = scmp.ne.s32.totalorder %s65, %s68
      %p77 = scmp.eq.s32.totalorder %s18, 1
      %p78 = por %p76, %p77
      %p79 = scmp.ne.s32.totalorder %s68, %s69
      %p80 = scmp.eq.s32.totalorder %s18, 0
      %p81 = por %p79, %p80
      %p82 = scmp.ne.s32.totalorder %s68, %s69
      %p83 = scmp.eq.s32.totalorder %s19, 1
      %p84 = por %p82, %p83
      %p86 = scmp.ne.s32.totalorder %s69, %s85
      %p87 = scmp.eq.s32.totalorder %s19, 0
      %p88 = por %p86, %p87
      %p89 = scmp.le.s32.totalorder 1, %s13
      %p90 = scmp.lt.s32.totalorder %s13, 3
      %p91 = pnand %p89, %p90
      %p92 = pneg %p91
      // Predicated region
      $region9: #{tpu_custom_call.1} parent=5 // pred_check
        _
      $region10: #{tpu_custom_call.1} parent=5 // pred_check_branch
        %94 = sbr.rel (%p91) target = $region12
      $region11: #{tpu_custom_call.1} parent=5 // pred_region
        %s95 = ssub.s32 %s13, 1
      $region12: #{tpu_custom_call.1} parent=5 // pred_fallthru
        _
      %p96 = scmp.lt.s32.totalorder %s13, 2
      // Predicated region
      $region13: #{tpu_custom_call.1} parent=5 // pred_check
        %p97 = pneg %p96
      $region14: #{tpu_custom_call.1} parent=5 // pred_check_branch
        %99 = sbr.rel (%p97) target = $region16
      $region15: #{tpu_custom_call.1} parent=5 // pred_region
        // Predicated region
        $region17: #{tpu_custom_call.1} parent=15 // pred_check
          %p100 = pneg %p47
        $region18: #{tpu_custom_call.1} parent=15 // pred_check_branch
          %102 = sbr.rel (%p100) target = $region20
        $region19: #{tpu_custom_call.1} parent=15 // pred_region
          %s103 = sand.u32 %s37, 1
          %s104 = scalar_lea.sflag [#allocation3], %s103
          %s105 = sand.u32 %s37, 1
          %s106 = smul.addr %s105, 8
          %s107 = scalar_lea.vmem [#allocation2], %s106
          %s109 = ssub.s32 128, 128
          %110 = vsyncadd %s104, %s109
          %s111 = smul.addr %s21, 2
          %s112 = smul.addr %s20, 2
          %s113 = sadd.s32 %s111, %s112
          %s114 = smul.addr %s113, 64
          %s115 = scalar_lea.hbm %s0, %s114
          %s117 = sshll.u32 %s107, 4
          %s118 = int_to_ptr.vmem [resolvable:$true] %s117
          %120 = dma.hbm_to_vmem [thread:$0]  %s115, 128, %s118, %s104
        $region20: #{tpu_custom_call.1} parent=15 // pred_fallthru
          _
      $region16: #{tpu_custom_call.1} parent=5 // pred_fallthru
        _
      %p121 = scmp.le.s32.totalorder 1, %s13
      %p122 = scmp.lt.s32.totalorder %s13, 3
      %p123 = pnand %p121, %p122
      %p124 = pneg %p123
      // Predicated region
      $region21: #{tpu_custom_call.1} parent=5 // pred_check
        _
      $region22: #{tpu_custom_call.1} parent=5 // pred_check_branch
        %126 = sbr.rel (%p123) target = $region24
      $region23: #{tpu_custom_call.1} parent=5 // pred_region
        %s127 = ssub.s32 %s13, 1
        %s128 = sand.u32 %s40, 1
        %s129 = scalar_lea.sflag [#allocation3], %s128
        %s130 = sand.u32 %s40, 1
        %s131 = smul.addr %s130, 8
        %s132 = scalar_lea.vmem [#allocation2], %s131
        // Predicated region
        $region25: #{tpu_custom_call.1} parent=23 // pred_check
          %p133 = pneg %p53
        $region26: #{tpu_custom_call.1} parent=23 // pred_check_branch
          %135 = sbr.rel (%p133) target = $region28
        $region27: #{tpu_custom_call.1} parent=23 // pred_region
          %136 = dma.done %s129, 128
        $region28: #{tpu_custom_call.1} parent=23 // pred_fallthru
          _
        %s137 = sand.u32 %s40, 1
        %s138 = scalar_lea.sflag [#allocation3], %s137
        %s139 = sand.u32 %s40, 1
        %s140 = smul.addr %s139, 8
        %s141 = scalar_lea.vmem [#allocation2], %s140
        %p142 = pneg %p53
        %p143 = pneg %p50
        %p144 = pneg %p81
        %p145 = pneg %p78
        %s146 = sand.u32 %s68, 1
        %s147 = scalar_lea.sflag [#allocation4], %s146
        %s148 = sand.u32 %s68, 1
        %s149 = scalar_lea.vmem [#allocation5], %s148
        %v150 = vld [vmem:[%s132] sm:$0xff]
        %v152 = vcombine.high %v150, %v150
        %vm154 = vcmask 1043456
        %v155 = vsel %vm154, %v150, 0.0
        %v156 = vsel %vm154, %v152, 0.0
        %v157 = vadd.f32 %v155, %v156
        %158 = vadd.xlane.f32.xlu0 %v157
        %v159 = vpop.xlane.xlu0 %158
        %v160 = vmul.f32 %v159, 0.00390625
        %v162 = vlaneseq
        %v163 = vand.u32 %v162, 127
        %v164 = vlaneseq
        %v165 = vshrl.u32 %v164, 7
        %v166 = vsub.s32 %v163, %v165
        %v167 = vrot.slane %v160, %v166
        %vm169 = vcmask 24576
        %170 = vst.msk [vmem:[%s149] sm:$0x1] %vm169, %v167
        %s171 = sand.u32 %s68, 1
        %s172 = scalar_lea.sflag [#allocation4], %s171
        %s173 = sand.u32 %s68, 1
        %s174 = scalar_lea.vmem [#allocation5], %s173
        // Predicated region
        $region29: #{tpu_custom_call.1} parent=23 // pred_check
          %p175 = pneg %p78
        $region30: #{tpu_custom_call.1} parent=23 // pred_check_branch
          %177 = sbr.rel (%p175) target = $region32
        $region31: #{tpu_custom_call.1} parent=23 // pred_region
          %s179 = ssub.s32 16, 16
          %180 = vsyncadd %s172, %s179
          %s181 = sadd.s32 %s23, %s22
          %s182 = smul.addr %s181, 16
          %s183 = scalar_lea.hbm %s1, %s182
          %s185 = sshll.u32 %s174, 4
          %s186 = int_to_ptr.vmem [resolvable:$true] %s185
          %188 = dma.vmem_to_hbm [thread:$0]  %s186, 16, %s183, %s172
        $region32: #{tpu_custom_call.1} parent=23 // pred_fallthru
          _
      $region24: #{tpu_custom_call.1} parent=5 // pred_fallthru
        _
      %p189 = scmp.le.s32.totalorder 2, %s13
      // Predicated region
      $region33: #{tpu_custom_call.1} parent=5 // pred_check
        %p190 = pneg %p189
      $region34: #{tpu_custom_call.1} parent=5 // pred_check_branch
        %192 = sbr.rel (%p190) target = $region36
      $region35: #{tpu_custom_call.1} parent=5 // pred_region
        %s193 = ssub.s32 %s13, 2
        // Predicated region
        $region37: #{tpu_custom_call.1} parent=35 // pred_check
          %p194 = pneg %p84
        $region38: #{tpu_custom_call.1} parent=35 // pred_check_branch
          %196 = sbr.rel (%p194) target = $region40
        $region39: #{tpu_custom_call.1} parent=35 // pred_region
          %s197 = sand.u32 %s69, 1
          %s198 = scalar_lea.sflag [#allocation4], %s197
          %s199 = sand.u32 %s69, 1
          %s200 = scalar_lea.vmem [#allocation5], %s199
          %201 = dma.done %s198, 16
        $region40: #{tpu_custom_call.1} parent=35 // pred_fallthru
          _
      $region36: #{tpu_custom_call.1} parent=5 // pred_fallthru
        _
    $region6: #{tpu_custom_call.1} parent=1 // loop_footer
      %s17 = sadd.s32 1, %s13
    $region7: #{tpu_custom_call.1} parent=1 // loop_footer_branch
      %12 = sbr.rel target = $region3
    $region8: #{tpu_custom_call.1} parent=1 // loop_exit
      _
    %202 = vsyncpa [#allocation3], 1
    %s203 = scalar_lea.sflag [#allocation3], 1
    %204 = vsyncpa %s203, 1
    %205 = vsyncpa [#allocation4], 1
    %s206 = scalar_lea.sflag [#allocation4], 1
    %207 = vsyncpa %s206, 1

</llo_original>
